<compile_context>
chip_gen: v7x
topology: tpu7x:2x2x1
jax: 0.10.0
libtpu: 0.0.40
codegen_flags: <defaults>
</compile_context>

<pallas_src>
import jax
import jax.numpy as jnp
from jax import lax
from jax.experimental import pallas as pl
from jax.experimental.pallas import tpu as pltpu


NEG_SLOPE = 0.1       # nn.LeakyReLU(0.1)
MAX_TILE_B = 32768    # f32 x tile @ input_dim=32 -> 4 MiB; 2x-buffered 8 MiB


def _leaky_relu(x):
    return jnp.where(x > 0, x, NEG_SLOPE * x)


def mlp_kernel(x_ref, w1t_ref, b1_ref, w2t_ref, b2_ref, w3_ref, b3_ref, out_ref):
    # x_ref: (TILE_B, D) block of the batch; all weights resident across steps.
    x = x_ref[...]                                    # (TILE_B, D)

    # Layer 1: (16, D) · (TILE_B, D) contracting D with D  ->  (16, TILE_B)
    # (QK^T-style "NT" contraction: batch stays in the lane axis, no transpose.)
    h1t = lax.dot_general(
        w1t_ref[...], x,
        dimension_numbers=(((1,), (1,)), ((), ())),
        preferred_element_type=jnp.float32,
    )
    h1t = _leaky_relu(h1t + b1_ref[...])              # b1: (16, 1) lane-broadcast

    # Layer 2: (8, 16) @ (16, TILE_B) -> (8, TILE_B)
    h2t = jnp.dot(w2t_ref[...], h1t, preferred_element_type=jnp.float32)
    h2t = _leaky_relu(h2t + b2_ref[...])              # b2: (8, 1)

    # Layer 3: (1, 8) @ (8, TILE_B) -> (1, TILE_B)  => lane-dense output row.
    y = jnp.dot(w3_ref[...], h2t, preferred_element_type=jnp.float32) + b3_ref[...]

    out_ref[...] = y.astype(out_ref.dtype)


def _round_up(n, m):
    return ((n + m - 1) // m) * m


def my_model_forward(x, params, *, tile_b=MAX_TILE_B):
    """x: (B, input_dim) float32. Returns (B,) float32, matching torch forward."""
    w1t, b1, w2t, b2, w3, b3 = params
    B, D = x.shape

    # Lane-aligned batch tile; no host-side padding of x (Pallas masks the
    # partial trailing block, avoiding an extra full HBM read+write pass).
    tile_b = max(128, min(tile_b, _round_up(B, 128)))
    grid = (pl.cdiv(B, tile_b),)

    const = lambda i: (0, 0)  # weights/biases: same block every step -> resident

    out = pl.pallas_call(
        mlp_kernel,
        out_shape=jax.ShapeDtypeStruct((1, B), jnp.float32),
        grid=grid,
        in_specs=[
            pl.BlockSpec((tile_b, D), lambda i: (i, 0)),   # x (streamed, pipelined)
            pl.BlockSpec((16, D), const),                  # w1t  (out, in)
            pl.BlockSpec((16, 1), const),                  # b1   (out, 1)
            pl.BlockSpec((8, 16), const),                  # w2t  (out, in)
            pl.BlockSpec((8, 1), const),                   # b2   (out, 1)
            pl.BlockSpec((1, 8), const),                   # w3   (1, in)
            pl.BlockSpec((1, 1), const),                   # b3
        ],
        out_specs=pl.BlockSpec((1, tile_b), lambda i: (0, i)),
        compiler_params=pltpu.CompilerParams(
            # "parallel" is safe on every generation; on v7x an explicit
            # CORE_PARALLEL / pl.core_map split over the 2 TCs could add up to 2x.
            dimension_semantics=("parallel",),
            vmem_limit_bytes=32 * 1024 * 1024,
        ),
    )(x, w1t, b1, w2t, b2, w3, b3)

    return out[0, :]  # (B,), emulates torch's x.squeeze(1)


def init_params(key, input_dim):
    """Deterministic init, torch nn.Linear-style ranges, stored pre-transposed:
    w1t (16, D), b1 (16, 1), w2t (8, 16), b2 (8, 1), w3 (1, 8), b3 (1, 1)."""
    def uniform(k, shape, fan_in):
        bound = 1.0 / float(fan_in) ** 0.5
        return jax.random.uniform(k, shape, jnp.float32, -bound, bound)

    k1w, k1b, k2w, k2b, k3w, k3b = jax.random.split(key, 6)
    w1t = uniform(k1w, (16, input_dim), input_dim)
    b1 = uniform(k1b, (16, 1), input_dim)
    w2t = uniform(k2w, (8, 16), 16)
    b2 = uniform(k2b, (8, 1), 16)
    w3 = uniform(k3w, (1, 8), 8)
    b3 = uniform(k3b, (1, 1), 8)
    return (w1t, b1, w2t, b2, w3, b3)


def reference_forward(x, params):
    """Pure-JAX reference for correctness check (same math, batch-major)."""
    w1t, b1, w2t, b2, w3, b3 = params
    h = _leaky_relu(x @ w1t.T + b1[:, 0])
    h = _leaky_relu(h @ w2t.T + b2[:, 0])
    y = h @ w3.T + b3            # (B, 1)
    return y[:, 0]


if __name__ == "__main__":
    key = jax.random.PRNGKey(0)
    input_dim = 32
    kx, kx2, kp = jax.random.split(key, 3)
    params = init_params(kp, input_dim)

    # Small single-(partial-)tile case: B=8 < 128, exercises block masking.
    x = jax.random.normal(kx, (8, input_dim), dtype=jnp.float32)
    out = jax.block_until_ready(my_model_forward(x, params))
    ref = reference_forward(x, params)
    assert out.shape == (8,)
    assert jnp.allclose(out, ref, atol=1e-4, rtol=1e-4), "mismatch vs JAX reference"

    # Multi-tile case with a ragged tail (300 = 2*128 + 44): exercises the grid,
    # resident weights, and the partial trailing block with no host padding.
    x2 = jax.random.normal(kx2, (300, input_dim), dtype=jnp.float32)
    out2 = jax.block_until_ready(my_model_forward(x2, params, tile_b=128))
    ref2 = reference_forward(x2, params)
    assert out2.shape == (300,)
    assert jnp.allclose(out2, ref2, atol=1e-4, rtol=1e-4), "mismatch vs JAX reference"

    print("KERNEL_OK")
</pallas_src>

<mosaic_0001>
module attributes {stable_mosaic.version = 11 : i64} {
  func.func @mlp_kernel(%arg0: i32, %arg1: memref<128x32xf32, #tpu.memory_space<vmem>>, %arg2: memref<16x32xf32, #tpu.memory_space<vmem>>, %arg3: memref<16x1xf32, #tpu.memory_space<vmem>>, %arg4: memref<8x16xf32, #tpu.memory_space<vmem>>, %arg5: memref<8x1xf32, #tpu.memory_space<vmem>>, %arg6: memref<1x8xf32, #tpu.memory_space<vmem>>, %arg7: memref<1x1xf32, #tpu.memory_space<vmem>>, %arg8: memref<1x128xf32, #tpu.memory_space<vmem>>) attributes {dimension_semantics = [#tpu.dimension_semantics<parallel>], iteration_bounds = array<i64: 1>, scalar_prefetch = 0 : i64, scratch_operands = 0 : i64, tpu.core_type = #tpu.core_type<tc>, window_params = [{transform_indices = @transform_0, window_bounds = array<i64: 128, 32>}, {pipeline_mode = #tpu.pipeline_mode<synchronous>, transform_indices = @transform_1, window_bounds = array<i64: 16, 32>}, {pipeline_mode = #tpu.pipeline_mode<synchronous>, transform_indices = @transform_2, window_bounds = array<i64: 16, 1>}, {pipeline_mode = #tpu.pipeline_mode<synchronous>, transform_indices = @transform_3, window_bounds = array<i64: 8, 16>}, {pipeline_mode = #tpu.pipeline_mode<synchronous>, transform_indices = @transform_4, window_bounds = array<i64: 8, 1>}, {pipeline_mode = #tpu.pipeline_mode<synchronous>, transform_indices = @transform_5, window_bounds = array<i64: 1, 8>}, {pipeline_mode = #tpu.pipeline_mode<synchronous>, transform_indices = @transform_6, window_bounds = array<i64: 1, 1>}, {transform_indices = @transform_7, window_bounds = array<i64: 1, 128>}]} {
    %c0 = arith.constant 0 : index
    %c0_0 = arith.constant 0 : index
    %0 = vector.load %arg1[%c0, %c0_0] : memref<128x32xf32, #tpu.memory_space<vmem>>, vector<128x32xf32>
    %c0_1 = arith.constant 0 : index
    %c0_2 = arith.constant 0 : index
    %1 = vector.load %arg2[%c0_1, %c0_2] : memref<16x32xf32, #tpu.memory_space<vmem>>, vector<16x32xf32>
    %cst = arith.constant dense<0.000000e+00> : vector<16x128xf32>
    %2 = tpu.matmul %1, %0, %cst {dimension_numbers = #tpu.dot_dimension_numbers<[1], [1], [0], [0], [0, 0, 1, 0], [], []>} : vector<16x32xf32>, vector<128x32xf32>, vector<16x128xf32> -> vector<16x128xf32>
    %c0_3 = arith.constant 0 : index
    %c0_4 = arith.constant 0 : index
    %3 = vector.load %arg3[%c0_3, %c0_4] : memref<16x1xf32, #tpu.memory_space<vmem>>, vector<16x1xf32>
    %4 = vector.broadcast %3 : vector<16x1xf32> to vector<16x128xf32>
    %5 = arith.addf %2, %4 : vector<16x128xf32>
    %cst_5 = arith.constant 0.000000e+00 : f32
    %6 = vector.broadcast %cst_5 : f32 to vector<16x128xf32>
    %7 = arith.cmpf ogt, %5, %6 : vector<16x128xf32>
    %cst_6 = arith.constant 1.000000e-01 : f32
    %8 = vector.broadcast %cst_6 : f32 to vector<16x128xf32>
    %9 = arith.mulf %8, %5 : vector<16x128xf32>
    %10 = arith.select %7, %5, %9 : vector<16x128xi1>, vector<16x128xf32>
    %c0_7 = arith.constant 0 : index
    %c0_8 = arith.constant 0 : index
    %11 = vector.load %arg4[%c0_7, %c0_8] : memref<8x16xf32, #tpu.memory_space<vmem>>, vector<8x16xf32>
    %cst_9 = arith.constant dense<0.000000e+00> : vector<8x128xf32>
    %12 = tpu.matmul %11, %10, %cst_9 {dimension_numbers = #tpu.dot_dimension_numbers<[1], [0], [0], [1], [0, 0, 1, 1], [], []>} : vector<8x16xf32>, vector<16x128xf32>, vector<8x128xf32> -> vector<8x128xf32>
    %c0_10 = arith.constant 0 : index
    %c0_11 = arith.constant 0 : index
    %13 = vector.load %arg5[%c0_10, %c0_11] : memref<8x1xf32, #tpu.memory_space<vmem>>, vector<8x1xf32>
    %14 = vector.broadcast %13 : vector<8x1xf32> to vector<8x128xf32>
    %15 = arith.addf %12, %14 : vector<8x128xf32>
    %cst_12 = arith.constant 0.000000e+00 : f32
    %16 = vector.broadcast %cst_12 : f32 to vector<8x128xf32>
    %17 = arith.cmpf ogt, %15, %16 : vector<8x128xf32>
    %cst_13 = arith.constant 1.000000e-01 : f32
    %18 = vector.broadcast %cst_13 : f32 to vector<8x128xf32>
    %19 = arith.mulf %18, %15 : vector<8x128xf32>
    %20 = arith.select %17, %15, %19 : vector<8x128xi1>, vector<8x128xf32>
    %c0_14 = arith.constant 0 : index
    %c0_15 = arith.constant 0 : index
    %21 = vector.load %arg6[%c0_14, %c0_15] : memref<1x8xf32, #tpu.memory_space<vmem>>, vector<1x8xf32>
    %cst_16 = arith.constant dense<0.000000e+00> : vector<1x128xf32>
    %22 = tpu.matmul %21, %20, %cst_16 {dimension_numbers = #tpu.dot_dimension_numbers<[1], [0], [0], [1], [0, 0, 1, 1], [], []>} : vector<1x8xf32>, vector<8x128xf32>, vector<1x128xf32> -> vector<1x128xf32>
    %c0_17 = arith.constant 0 : index
    %c0_18 = arith.constant 0 : index
    %23 = vector.load %arg7[%c0_17, %c0_18] : memref<1x1xf32, #tpu.memory_space<vmem>>, vector<1x1xf32>
    %24 = vector.broadcast %23 : vector<1x1xf32> to vector<1x128xf32>
    %25 = arith.addf %22, %24 : vector<1x128xf32>
    %c0_19 = arith.constant 0 : index
    %c0_20 = arith.constant 0 : index
    %26 = vector.load %arg8[%c0_19, %c0_20] : memref<1x128xf32, #tpu.memory_space<vmem>>, vector<1x128xf32>
    tpu.vector_store %arg8[%c0_19, %c0_20], %25 {strides = array<i32>} : memref<1x128xf32, #tpu.memory_space<vmem>>, vector<1x128xf32>,
    return
  }
  func.func @transform_0(%arg0: i32) -> (i32, i32) {
    %c0_i32 = arith.constant 0 : i32
    %c0_i32_0 = arith.constant 0 : i32
    return %arg0, %c0_i32 : i32, i32
  }
  func.func @transform_1(%arg0: i32) -> (i32, i32) {
    %c0_i32 = arith.constant 0 : i32
    %c0_i32_0 = arith.constant 0 : i32
    %c0_i32_1 = arith.constant 0 : i32
    return %c0_i32, %c0_i32_0 : i32, i32
  }
  func.func @transform_2(%arg0: i32) -> (i32, i32) {
    %c0_i32 = arith.constant 0 : i32
    %c0_i32_0 = arith.constant 0 : i32
    %c0_i32_1 = arith.constant 0 : i32
    return %c0_i32, %c0_i32_0 : i32, i32
  }
  func.func @transform_3(%arg0: i32) -> (i32, i32) {
    %c0_i32 = arith.constant 0 : i32
    %c0_i32_0 = arith.constant 0 : i32
    %c0_i32_1 = arith.constant 0 : i32
    return %c0_i32, %c0_i32_0 : i32, i32
  }
  func.func @transform_4(%arg0: i32) -> (i32, i32) {
    %c0_i32 = arith.constant 0 : i32
    %c0_i32_0 = arith.constant 0 : i32
    %c0_i32_1 = arith.constant 0 : i32
    return %c0_i32, %c0_i32_0 : i32, i32
  }
  func.func @transform_5(%arg0: i32) -> (i32, i32) {
    %c0_i32 = arith.constant 0 : i32
    %c0_i32_0 = arith.constant 0 : i32
    %c0_i32_1 = arith.constant 0 : i32
    return %c0_i32, %c0_i32_0 : i32, i32
  }
  func.func @transform_6(%arg0: i32) -> (i32, i32) {
    %c0_i32 = arith.constant 0 : i32
    %c0_i32_0 = arith.constant 0 : i32
    %c0_i32_1 = arith.constant 0 : i32
    return %c0_i32, %c0_i32_0 : i32, i32
  }
  func.func @transform_7(%arg0: i32) -> (i32, i32) {
    %c0_i32 = arith.constant 0 : i32
    %c0_i32_0 = arith.constant 0 : i32
    return %c0_i32, %arg0 : i32, i32
  }
}

</mosaic_0001>

<llo_original>
// kernel: tpu_custom_call.1
$region0: #{tpu_custom_call.1}
  #allocation0 [shape = 'u32[]', space=smem, size = 0x4, offset = 0x4, fixed_abs, tag = 'smem constant byte address 0x4 - core index']
  #allocation1 [shape = 'u32[144,128]{1,0:T(1,128)}', space=vmem, size = 0x12000, scoped, tag = 'internal scratch']
  #allocation2 [shape = 'f32[1,1]{1,0:T(1,128)S(1)}', space=vmem, size = 0x200, scoped, tag = 'scoped memory for tpu_custom_call.1']
  %s0 = inlined_call_operand.vmem [shape: f32[8,32], index: 0, kind: input, shape index: {}]
  %s1 = inlined_call_operand.vmem [shape: f32[16,32], index: 1, kind: input, shape index: {}]
  %s2 = inlined_call_operand.vmem [shape: f32[16,1], index: 2, kind: input, shape index: {}]
  %s3 = inlined_call_operand.vmem [shape: f32[8,16], index: 3, kind: input, shape index: {}]
  %s4 = inlined_call_operand.vmem [shape: f32[8,1], index: 4, kind: input, shape index: {}]
  %s5 = inlined_call_operand.vmem [shape: f32[1,8], index: 5, kind: input, shape index: {}]
  %s6 = inlined_call_operand.<no memory space> [shape: f32[1,1], index: 6, kind: input, shape index: {}]
  %s7 = inlined_call_operand.hbm [shape: f32[1,8], index: 7, kind: output, shape index: {}]
  %s8 = sld [smem:[#allocation0]]
  $region38: #{tpu_custom_call.1} parent=0
    _
  %s10 = ssub.s32 1, %s8
  %s11 = scalar_select 0, %s10, %s8
  %v12 = vstv %s6
  %13 = vst [vmem:[#allocation2] sm:$0x1] %v12
  $region1: #{tpu_custom_call.1} parent=0
    #allocation3 [shape = 'u8[512]{0}', space=vmem, size = 0x400, scoped, tag = 'output window, operand 0, single buffered']
    #allocation4 [shape = 's32[1]{0}', space=sflag, size = 0x4, scoped, tag = 'scoped memory for tpu_custom_call.1']
    %14 = vsyncpa [#allocation4], 0
    // Predicated region
    $region2: #{tpu_custom_call.1} parent=1 // pred_check
      _
    $region3: #{tpu_custom_call.1} parent=1 // pred_check_branch
      %16 = sbr.rel (0) target = $region5
    $region4: #{tpu_custom_call.1} parent=1 // pred_region
      _
    $region5: #{tpu_custom_call.1} parent=1 // pred_fallthru
      _
    // Predicated region
    $region6: #{tpu_custom_call.1} parent=1 // pred_check
      _
    $region7: #{tpu_custom_call.1} parent=1 // pred_check_branch
      %18 = sbr.rel (0) target = $region9
    $region8: #{tpu_custom_call.1} parent=1 // pred_region
      _
    $region9: #{tpu_custom_call.1} parent=1 // pred_fallthru
      _
    // Predicated region
    $region10: #{tpu_custom_call.1} parent=1 // pred_check
      _
    $region11: #{tpu_custom_call.1} parent=1 // pred_check_branch
      %20 = sbr.rel (0) target = $region13
    $region12: #{tpu_custom_call.1} parent=1 // pred_region
      _
    $region13: #{tpu_custom_call.1} parent=1 // pred_fallthru
      _
    // Predicated region
    $region14: #{tpu_custom_call.1} parent=1 // pred_check
      _
    $region15: #{tpu_custom_call.1} parent=1 // pred_check_branch
      %22 = sbr.rel (0) target = $region17
    $region16: #{tpu_custom_call.1} parent=1 // pred_region
      _
    $region17: #{tpu_custom_call.1} parent=1 // pred_fallthru
      _
    // Predicated region
    $region18: #{tpu_custom_call.1} parent=1 // pred_check
      _
    $region19: #{tpu_custom_call.1} parent=1 // pred_check_branch
      %24 = sbr.rel (0) target = $region21
    $region20: #{tpu_custom_call.1} parent=1 // pred_region
      _
    $region21: #{tpu_custom_call.1} parent=1 // pred_fallthru
      _
    // Predicated region
    $region22: #{tpu_custom_call.1} parent=1 // pred_check
      _
    $region23: #{tpu_custom_call.1} parent=1 // pred_check_branch
      %26 = sbr.rel (0) target = $region25
    $region24: #{tpu_custom_call.1} parent=1 // pred_region
      _
    $region25: #{tpu_custom_call.1} parent=1 // pred_fallthru
      _
    // Predicated region
    $region26: #{tpu_custom_call.1} parent=1 // pred_check
      _
    $region27: #{tpu_custom_call.1} parent=1 // pred_check_branch
      %28 = sbr.rel (0) target = $region29
    $region28: #{tpu_custom_call.1} parent=1 // pred_region
      _
    $region29: #{tpu_custom_call.1} parent=1 // pred_fallthru
      _
    %v29 = vld [vmem:[%s0] sm:$0xff]
    %v30 = vld [vmem:[%s0 + $0x8] sm:$0xff]
    %v31 = vld [vmem:[%s0 + $0x10] sm:$0xff]
    %v32 = vld [vmem:[%s0 + $0x18] sm:$0xff]
    %v33 = vld [vmem:[%s0 + $0x20] sm:$0xff]
    %v34 = vld [vmem:[%s0 + $0x28] sm:$0xff]
    %v35 = vld [vmem:[%s0 + $0x30] sm:$0xff]
    %v36 = vld [vmem:[%s0 + $0x38] sm:$0xff]
    %v37 = vld [vmem:[%s0 + $0x40] sm:$0xff]
    %v38 = vld [vmem:[%s0 + $0x48] sm:$0xff]
    %v39 = vld [vmem:[%s0 + $0x50] sm:$0xff]
    %v40 = vld [vmem:[%s0 + $0x58] sm:$0xff]
    %v41 = vld [vmem:[%s0 + $0x60] sm:$0xff]
    %v42 = vld [vmem:[%s0 + $0x68] sm:$0xff]
    %v43 = vld [vmem:[%s0 + $0x70] sm:$0xff]
    %v44 = vld [vmem:[%s0 + $0x78] sm:$0xff]
    %v45 = vld [vmem:[%s1] sm:$0xff]
    %v46 = vld [vmem:[%s1 + $0x8] sm:$0xff]
    %v47 = vld [vmem:[%s2] sm:$0xff]
    %v48 = vld [vmem:[%s2 + $0x8] sm:$0xff]
    %50 = vset.pattern.permute.xlu0 0
    %51 = vperm.xlu0 %50, %v47
    %v52 = vpop.permute.xlu0 %51
    %55 = vset.pattern.permute.xlu0 0
    %56 = vperm.xlu0 %55, %v48
    %v57 = vpop.permute.xlu0 %56
    %vm59 = vcmask 261120
    %v61 = vsel %vm59, %v45, 0
    %v64 = vsel %vm59, %v46, 0
    %v67 = vsel %vm59, %v29, 0
    %v70 = vsel %vm59, %v30, 0
    %v73 = vsel %vm59, %v31, 0
    %v76 = vsel %vm59, %v32, 0
    %v79 = vsel %vm59, %v33, 0
    %v82 = vsel %vm59, %v34, 0
    %v85 = vsel %vm59, %v35, 0
    %v88 = vsel %vm59, %v36, 0
    %v91 = vsel %vm59, %v37, 0
    %v94 = vsel %vm59, %v38, 0
    %v97 = vsel %vm59, %v39, 0
    %v100 = vsel %vm59, %v40, 0
    %v103 = vsel %vm59, %v41, 0
    %v106 = vsel %vm59, %v42, 0
    %v109 = vsel %vm59, %v43, 0
    %v112 = vsel %vm59, %v44, 0
    %114 = vmatprep.subr.mxu0 0.0
    %115 = vmatpush1.xpose.msra.mxu0 %v67
    %116 = vmatprep.subr.mxu0 0.0
    %117 = vmatpush1.xpose.msra.mxu0 %v70
    %118 = vmatprep.subr.mxu0 0.0
    %119 = vmatpush1.xpose.msra.mxu0 %v73
    %120 = vmatprep.subr.mxu0 0.0
    %121 = vmatpush1.xpose.msra.mxu0 %v76
    %122 = vmatprep.subr.mxu0 0.0
    %123 = vmatpush1.xpose.msra.mxu0 %v79
    %124 = vmatprep.subr.mxu0 0.0
    %125 = vmatpush1.xpose.msra.mxu0 %v82
    %126 = vmatprep.subr.mxu0 0.0
    %127 = vmatpush1.xpose.msra.mxu0 %v85
    %128 = vmatprep.subr.mxu0 0.0
    %129 = vmatpush1.xpose.msra.mxu0 %v88
    %130 = vmatprep.subr.mxu0 0.0
    %131 = vmatpush1.xpose.msra.mxu0 %v91
    %132 = vmatprep.subr.mxu0 0.0
    %133 = vmatpush1.xpose.msra.mxu0 %v94
    %134 = vmatprep.subr.mxu0 0.0
    %135 = vmatpush1.xpose.msra.mxu0 %v97
    %136 = vmatprep.subr.mxu0 0.0
    %137 = vmatpush1.xpose.msra.mxu0 %v100
    %138 = vmatprep.subr.mxu0 0.0
    %139 = vmatpush1.xpose.msra.mxu0 %v103
    %140 = vmatprep.subr.mxu0 0.0
    %141 = vmatpush1.xpose.msra.mxu0 %v106
    %142 = vmatprep.subr.mxu0 0.0
    %143 = vmatpush1.xpose.msra.mxu0 %v109
    %144 = vmatprep.subr.mxu0 0.0
    %145 = vmatpush1.xpose.msra.mxu0 %v112
    %146 = vmatprep.subr.mxu0 0.0
    %147 = vmatpush1.xpose.msra.mxu0 0.0
    %148 = vmatprep.subr.mxu0 0.0
    %149 = vmatpush1.xpose.msra.mxu0 0.0
    %150 = vmatprep.subr.mxu0 0.0
    %151 = vmatpush1.xpose.msra.mxu0 0.0
    %152 = vmatprep.subr.mxu0 0.0
    %153 = vmatpush1.xpose.msra.mxu0 0.0
    %154 = vmatprep.subr.mxu0 0.0
    %155 = vmatpush1.xpose.msra.mxu0 0.0
    %156 = vmatprep.subr.mxu0 0.0
    %157 = vmatpush1.xpose.msra.mxu0 0.0
    %158 = vmatprep.subr.mxu0 0.0
    %159 = vmatpush1.xpose.msra.mxu0 0.0
    %160 = vmatprep.subr.mxu0 0.0
    %161 = vmatpush1.xpose.msra.mxu0 0.0
    %162 = vmatprep.subr.mxu0 0.0
    %163 = vmatpush1.xpose.msra.mxu0 0.0
    %164 = vmatprep.subr.mxu0 0.0
    %165 = vmatpush1.xpose.msra.mxu0 0.0
    %166 = vmatprep.subr.mxu0 0.0
    %167 = vmatpush1.xpose.msra.mxu0 0.0
    %168 = vmatprep.subr.mxu0 0.0
    %169 = vmatpush1.xpose.msra.mxu0 0.0
    %170 = vmatprep.subr.mxu0 0.0
    %171 = vmatpush1.xpose.msra.mxu0 0.0
    %172 = vmatprep.subr.mxu0 0.0
    %173 = vmatpush1.xpose.msra.mxu0 0.0
    %174 = vmatprep.subr.mxu0 0.0
    %175 = vmatpush1.xpose.msra.mxu0 0.0
    %176 = vmatprep.subr.mxu0 0.0
    %177 = vmatpush1.xpose.msra.mxu0 0.0
    %178 = vmatprep.mubr.f32.mxu0 0.0
    %179 = vmatmul.mubr.f32.gmra.mrb[0].mxu0 %v61
    %v180 = vpop.f32.mrb[0].mxu0
    %v181 = vadd.f32 %v52, %v180
    %v182 = vpop.f32.mrb[0].mxu0
    %183 = vmatprep.mubr.f32.mxu0 0.0
    %184 = vmatmul.mubr.f32.gmra.mrb[0].mxu0 %v64
    %v185 = vpop.f32.mrb[0].mxu0
    %v186 = vadd.f32 %v57, %v185
    %v187 = vpop.f32.mrb[0].mxu0
    %188 = vdwg.mxu0
    %vm189 = vcmp.gt.f32.partialorder %v181, 0.0
    %vm190 = vcmp.gt.f32.partialorder %v186, 0.0
    %v191 = vmul.f32 %v181, 0.1
    %v192 = vmul.f32 %v186, 0.1
    %v193 = vsel %vm189, %v181, %v191
    %v194 = vsel %vm190, %v186, %v192
    %v195 = vld [vmem:[%s3] sm:$0xff]
    %v196 = vld [vmem:[%s4] sm:$0xff]
    %198 = vset.pattern.permute.xlu0 0
    %199 = vperm.xlu0 %198, %v196
    %v200 = vpop.permute.xlu0 %199
    %vm202 = vcmask 130048
    %v204 = vsel %vm202, %v195, 0
    %206 = vmatprep.subr.mxu0 0.0
    %207 = vmatpush1.msra.mxu0 %v193
    %208 = vmatprep.subr.mxu0 0.0
    %209 = vmatpush1.msra.mxu0 %v194
    %210 = vmatprep.subr.mxu0 0.0
    %211 = vmatpush1.msra.mxu0 0.0
    %212 = vmatprep.subr.mxu0 0.0
    %213 = vmatpush1.msra.mxu0 0.0
    %214 = vmatprep.subr.mxu0 0.0
    %215 = vmatpush1.msra.mxu0 0.0
    %216 = vmatprep.subr.mxu0 0.0
    %217 = vmatpush1.msra.mxu0 0.0
    %218 = vmatprep.subr.mxu0 0.0
    %219 = vmatpush1.msra.mxu0 0.0
    %220 = vmatprep.subr.mxu0 0.0
    %221 = vmatpush1.msra.mxu0 0.0
    %222 = vmatprep.subr.mxu0 0.0
    %223 = vmatpush1.msra.mxu0 0.0
    %224 = vmatprep.subr.mxu0 0.0
    %225 = vmatpush1.msra.mxu0 0.0
    %226 = vmatprep.subr.mxu0 0.0
    %227 = vmatpush1.msra.mxu0 0.0
    %228 = vmatprep.subr.mxu0 0.0
    %229 = vmatpush1.msra.mxu0 0.0
    %230 = vmatprep.subr.mxu0 0.0
    %231 = vmatpush1.msra.mxu0 0.0
    %232 = vmatprep.subr.mxu0 0.0
    %233 = vmatpush1.msra.mxu0 0.0
    %234 = vmatprep.subr.mxu0 0.0
    %235 = vmatpush1.msra.mxu0 0.0
    %236 = vmatprep.subr.mxu0 0.0
    %237 = vmatpush1.msra.mxu0 0.0
    %238 = vmatprep.subr.mxu0 0.0
    %239 = vmatpush1.msra.mxu0 0.0
    %240 = vmatprep.subr.mxu0 0.0
    %241 = vmatpush1.msra.mxu0 0.0
    %242 = vmatprep.subr.mxu0 0.0
    %243 = vmatpush1.msra.mxu0 0.0
    %244 = vmatprep.subr.mxu0 0.0
    %245 = vmatpush1.msra.mxu0 0.0
    %246 = vmatprep.subr.mxu0 0.0
    %247 = vmatpush1.msra.mxu0 0.0
    %248 = vmatprep.subr.mxu0 0.0
    %249 = vmatpush1.msra.mxu0 0.0
    %250 = vmatprep.subr.mxu0 0.0
    %251 = vmatpush1.msra.mxu0 0.0
    %252 = vmatprep.subr.mxu0 0.0
    %253 = vmatpush1.msra.mxu0 0.0
    %254 = vmatprep.subr.mxu0 0.0
    %255 = vmatpush1.msra.mxu0 0.0
    %256 = vmatprep.subr.mxu0 0.0
    %257 = vmatpush1.msra.mxu0 0.0
    %258 = vmatprep.subr.mxu0 0.0
    %259 = vmatpush1.msra.mxu0 0.0
    %260 = vmatprep.subr.mxu0 0.0
    %261 = vmatpush1.msra.mxu0 0.0
    %262 = vmatprep.subr.mxu0 0.0
    %263 = vmatpush1.msra.mxu0 0.0
    %264 = vmatprep.subr.mxu0 0.0
    %265 = vmatpush1.msra.mxu0 0.0
    %266 = vmatprep.subr.mxu0 0.0
    %267 = vmatpush1.msra.mxu0 0.0
    %268 = vmatprep.subr.mxu0 0.0
    %269 = vmatpush1.msra.mxu0 0.0
    %270 = vmatprep.mubr.f32.mxu0 0.0
    %271 = vmatmul.mubr.f32.gmra.mrb[0].mxu0 %v204
    %v272 = vpop.f32.mrb[0].mxu0
    %v273 = vadd.f32 %v200, %v272
    %v274 = vpop.f32.mrb[0].mxu0
    %275 = vdwg.mxu0
    %vm276 = vcmp.gt.f32.partialorder %v273, 0.0
    %v277 = vmul.f32 %v273, 0.1
    %v278 = vsel %vm276, %v273, %v277
    %v279 = vld [vmem:[%s5] sm:$0x1]
    %v280 = vld [vmem:[#allocation2] sm:$0x1]
    %282 = vset.pattern.permute.xlu0 0
    %283 = vperm.xlu0 %282, %v280
    %v284 = vpop.permute.xlu0 %283
    %v286 = vlaneseq
    %v287 = vshrl.u32 %v286, 7
    %v288 = vsub.s32 0, %v287
    %v289 = vrot.slane %v284, %v288
    %vm290 = vcmask 64512
    %v292 = vsel %vm290, %v279, 0
    %294 = vmatprep.subr.mxu0 0.0
    %295 = vmatpush1.msra.mxu0 %v278
    %296 = vmatprep.subr.mxu0 0.0
    %297 = vmatpush1.msra.mxu0 0.0
    %298 = vmatprep.subr.mxu0 0.0
    %299 = vmatpush1.msra.mxu0 0.0
    %300 = vmatprep.subr.mxu0 0.0
    %301 = vmatpush1.msra.mxu0 0.0
    %302 = vmatprep.subr.mxu0 0.0
    %303 = vmatpush1.msra.mxu0 0.0
    %304 = vmatprep.subr.mxu0 0.0
    %305 = vmatpush1.msra.mxu0 0.0
    %306 = vmatprep.subr.mxu0 0.0
    %307 = vmatpush1.msra.mxu0 0.0
    %308 = vmatprep.subr.mxu0 0.0
    %309 = vmatpush1.msra.mxu0 0.0
    %310 = vmatprep.subr.mxu0 0.0
    %311 = vmatpush1.msra.mxu0 0.0
    %312 = vmatprep.subr.mxu0 0.0
    %313 = vmatpush1.msra.mxu0 0.0
    %314 = vmatprep.subr.mxu0 0.0
    %315 = vmatpush1.msra.mxu0 0.0
    %316 = vmatprep.subr.mxu0 0.0
    %317 = vmatpush1.msra.mxu0 0.0
    %318 = vmatprep.subr.mxu0 0.0
    %319 = vmatpush1.msra.mxu0 0.0
    %320 = vmatprep.subr.mxu0 0.0
    %321 = vmatpush1.msra.mxu0 0.0
    %322 = vmatprep.subr.mxu0 0.0
    %323 = vmatpush1.msra.mxu0 0.0
    %324 = vmatprep.subr.mxu0 0.0
    %325 = vmatpush1.msra.mxu0 0.0
    %326 = vmatprep.subr.mxu0 0.0
    %327 = vmatpush1.msra.mxu0 0.0
    %328 = vmatprep.subr.mxu0 0.0
    %329 = vmatpush1.msra.mxu0 0.0
    %330 = vmatprep.subr.mxu0 0.0
    %331 = vmatpush1.msra.mxu0 0.0
    %332 = vmatprep.subr.mxu0 0.0
    %333 = vmatpush1.msra.mxu0 0.0
    %334 = vmatprep.subr.mxu0 0.0
    %335 = vmatpush1.msra.mxu0 0.0
    %336 = vmatprep.subr.mxu0 0.0
    %337 = vmatpush1.msra.mxu0 0.0
    %338 = vmatprep.subr.mxu0 0.0
    %339 = vmatpush1.msra.mxu0 0.0
    %340 = vmatprep.subr.mxu0 0.0
    %341 = vmatpush1.msra.mxu0 0.0
    %342 = vmatprep.subr.mxu0 0.0
    %343 = vmatpush1.msra.mxu0 0.0
    %344 = vmatprep.subr.mxu0 0.0
    %345 = vmatpush1.msra.mxu0 0.0
    %346 = vmatprep.subr.mxu0 0.0
    %347 = vmatpush1.msra.mxu0 0.0
    %348 = vmatprep.subr.mxu0 0.0
    %349 = vmatpush1.msra.mxu0 0.0
    %350 = vmatprep.subr.mxu0 0.0
    %351 = vmatpush1.msra.mxu0 0.0
    %352 = vmatprep.subr.mxu0 0.0
    %353 = vmatpush1.msra.mxu0 0.0
    %354 = vmatprep.subr.mxu0 0.0
    %355 = vmatpush1.msra.mxu0 0.0
    %356 = vmatprep.subr.mxu0 0.0
    %357 = vmatpush1.msra.mxu0 0.0
    %358 = vmatprep.mubr.f32.mxu0 0.0
    %359 = vmatmul.mubr.f32.gmra.mrb[0].mxu0 %v292
    %v360 = vpop.f32.mrb[0].mxu0
    %v361 = vadd.f32 %v289, %v360
    %v362 = vpop.f32.mrb[0].mxu0
    %363 = vdwg.mxu0
    %364 = vst [vmem:[#allocation3] sm:$0x1] %v361
    // Predicated region
    $region30: #{tpu_custom_call.1} parent=1 // pred_check
      _
    $region31: #{tpu_custom_call.1} parent=1 // pred_check_branch
      %366 = sbr.rel (0) target = $region33
    $region32: #{tpu_custom_call.1} parent=1 // pred_region
      %s368 = ssub.s32 16, 16
      %369 = vsyncadd [#allocation4], %s368
      %s371 = sshll.u32 [#allocation3], 4
      %s372 = int_to_ptr.vmem [resolvable:$true] %s371
      %374 = dma.vmem_to_hbm [thread:$0]  %s372, 16, %s7, [#allocation4]
    $region33: #{tpu_custom_call.1} parent=1 // pred_fallthru
      _
    // Predicated region
    $region34: #{tpu_custom_call.1} parent=1 // pred_check
      _
    $region35: #{tpu_custom_call.1} parent=1 // pred_check_branch
      %376 = sbr.rel (0) target = $region37
    $region36: #{tpu_custom_call.1} parent=1 // pred_region
      %377 = dma.done [#allocation4], 16
    $region37: #{tpu_custom_call.1} parent=1 // pred_fallthru
      _
    %378 = vsyncpa [#allocation4], 1

</llo_original>
